<compile_context>
chip_gen: v5e
topology: v5e:2x2
jax: 0.10.0
libtpu: 0.0.40
codegen_flags: <defaults>
</compile_context>

<pallas_src>
import jax
import jax.numpy as jnp
from jax import lax
from jax.experimental import pallas as pl
from jax.experimental.pallas import tpu as pltpu


# ---------------------------------------------------------------------------
# Kernels
# ---------------------------------------------------------------------------
def _make_moments_kernel(total_rows, block_rows, needs_mask):
    """means=None path: accumulate sum((p-t)^2), sum(t), sum(t^2) per lane."""

    def kernel(pred_ref, tgt_ref, err_ref, st_ref, st2_ref):
        bi = pl.program_id(1)

        @pl.when(bi == 0)
        def _():
            err_ref[...] = jnp.zeros_like(err_ref)
            st_ref[...] = jnp.zeros_like(st_ref)
            st2_ref[...] = jnp.zeros_like(st2_ref)

        p = pred_ref[...].astype(jnp.float32)
        t = tgt_ref[...].astype(jnp.float32)
        sq_err = (p - t) ** 2
        t_sq = t * t
        if needs_mask:  # static flag: only emitted when the last tile is partial
            rows = lax.broadcasted_iota(jnp.int32, p.shape, 0)
            valid = (bi * block_rows + rows) < total_rows
            sq_err = jnp.where(valid, sq_err, 0.0)
            t = jnp.where(valid, t, 0.0)
            t_sq = jnp.where(valid, t_sq, 0.0)
        err_ref[...] += jnp.sum(sq_err, axis=0, keepdims=True)
        st_ref[...] += jnp.sum(t, axis=0, keepdims=True)
        st2_ref[...] += jnp.sum(t_sq, axis=0, keepdims=True)

    return kernel


def _make_den_kernel(total_rows, block_rows, needs_mask):
    """Explicit-means path: accumulate sum((p-t)^2) and sum((t-m)^2) per lane."""

    def kernel(pred_ref, tgt_ref, means_ref, err_ref, den_ref):
        bi = pl.program_id(1)

        @pl.when(bi == 0)
        def _():
            err_ref[...] = jnp.zeros_like(err_ref)
            den_ref[...] = jnp.zeros_like(den_ref)

        p = pred_ref[...].astype(jnp.float32)
        t = tgt_ref[...].astype(jnp.float32)
        m = means_ref[...].astype(jnp.float32)          # (1, TS), broadcast over rows
        sq_err = (p - t) ** 2
        dev = t - m
        sq_dev = dev * dev
        if needs_mask:
            rows = lax.broadcasted_iota(jnp.int32, p.shape, 0)
            valid = (bi * block_rows + rows) < total_rows
            sq_err = jnp.where(valid, sq_err, 0.0)
            sq_dev = jnp.where(valid, sq_dev, 0.0)
        err_ref[...] += jnp.sum(sq_err, axis=0, keepdims=True)
        den_ref[...] += jnp.sum(sq_dev, axis=0, keepdims=True)

    return kernel


# ---------------------------------------------------------------------------
# Tiling helpers
# ---------------------------------------------------------------------------
def _pick_fold(batch, subbasins):
    """Fold factor so the lane axis is ~128 wide when S is small (free reshape)."""
    if subbasins >= 128:
        return 1
    target = max(1, 128 // subbasins)
    fold = 1
    for f in range(2, target + 1):
        if batch % f == 0:
            fold = f
    return fold


def _pick_block_rows(rows, lane_width, itemsize, max_block_rows=None):
    """Rows per tile so 2 inputs x 2 pipeline buffers stay under ~8 MiB VMEM."""
    budget = 8 * 1024 * 1024
    cap = max(16, budget // (4 * lane_width * itemsize))
    tb = min(rows, cap, 2048)
    if max_block_rows is not None:
        tb = min(tb, max_block_rows)
    if tb < rows:
        align = 16 if itemsize < 4 else 8   # bf16 packs 16 sublanes per vreg
        tb_aligned = (tb // align) * align
        tb = rows if tb_aligned == 0 else tb_aligned
    return tb


# ---------------------------------------------------------------------------
# Public wrapper
# ---------------------------------------------------------------------------
def nse_loss(prediction, target, means=None, *, max_block_rows=None):
    """Pallas NSE loss.

    Args:
      prediction: (B, S) array of predictions.
      target:     (B, S) array of targets (same shape/dtype family).
      means:      optional (S,) or (1, S) per-subbasin means.
      max_block_rows: optional cap on rows per batch tile (testing / tuning).
    Returns:
      scalar float32 mean NSE.
    """
    prediction = jnp.asarray(prediction)
    target = jnp.asarray(target)
    assert prediction.shape == target.shape and prediction.ndim == 2
    batch, subs = target.shape

    # Lane-dense layout: fold small-S arrays to (B/fold, fold*S) at zero cost.
    fold = _pick_fold(batch, subs)
    rows = batch // fold
    width = fold * subs
    pred_f = prediction.reshape(rows, width)
    tgt_f = target.reshape(rows, width)
    itemsize = max(prediction.dtype.itemsize, target.dtype.itemsize)

    # Lane tiling: split the lane axis in two when wide enough (megacore on v7x).
    if width >= 256 and width % 256 == 0:
        num_s, ts = 2, width // 2
    else:
        num_s, ts = 1, width

    tb = _pick_block_rows(rows, ts, itemsize, max_block_rows)
    nb = pl.cdiv(rows, tb)
    needs_mask = (rows % tb) != 0

    grid = (num_s, nb)
    data_spec = pl.BlockSpec((tb, ts), lambda si, bi: (bi, si))
    acc_spec = pl.BlockSpec((1, ts), lambda si, bi: (0, si))   # resident over batch
    acc_shape = jax.ShapeDtypeStruct((1, width), jnp.float32)

    compiler_params = pltpu.CompilerParams(
        dimension_semantics=("parallel", "arbitrary"))

    in_bytes = (pred_f.size * prediction.dtype.itemsize
                + tgt_f.size * target.dtype.itemsize)

    if means is None:
        kernel = _make_moments_kernel(rows, tb, needs_mask)
        cost = pl.CostEstimate(flops=5 * batch * subs, transcendentals=0,
                               bytes_accessed=in_bytes + 3 * width * 4)
        err, st, st2 = pl.pallas_call(
            kernel,
            grid=grid,
            in_specs=[data_spec, data_spec],
            out_specs=[acc_spec, acc_spec, acc_spec],
            out_shape=[acc_shape, acc_shape, acc_shape],
            compiler_params=compiler_params,
            cost_estimate=cost,
        )(pred_f, tgt_f)
        # Tiny finalize on W floats: unfold lanes back to subbasins.
        err = err.reshape(fold, subs).sum(axis=0)
        st = st.reshape(fold, subs).sum(axis=0)
        st2 = st2.reshape(fold, subs).sum(axis=0)
        den = st2 - (st * st) / jnp.float32(batch)
    else:
        means2d = jnp.asarray(means, dtype=jnp.float32).reshape(1, subs)
        means_f = jnp.tile(means2d, (1, fold))                 # (1, width), tiny
        kernel = _make_den_kernel(rows, tb, needs_mask)
        cost = pl.CostEstimate(flops=6 * batch * subs, transcendentals=0,
                               bytes_accessed=in_bytes + 3 * width * 4)
        err, den_acc = pl.pallas_call(
            kernel,
            grid=grid,
            in_specs=[data_spec, data_spec, acc_spec],         # means: resident block
            out_specs=[acc_spec, acc_spec],
            out_shape=[acc_shape, acc_shape],
            compiler_params=compiler_params,
            cost_estimate=cost,
        )(pred_f, tgt_f, means_f)
        err = err.reshape(fold, subs).sum(axis=0)
        den = den_acc.reshape(fold, subs).sum(axis=0)

    # TODO(synk): no epsilon on the denominator, matching the PyTorch module
    # (a constant-target subbasin produces inf/NaN there too).
    nses = err / den
    return nses.mean()


# ---------------------------------------------------------------------------
# Pure-JAX reference (mirrors the PyTorch module)
# ---------------------------------------------------------------------------
def _nse_loss_ref(prediction, target, means=None):
    prediction = prediction.astype(jnp.float32)
    target = target.astype(jnp.float32)
    if means is None:
        means = target.mean(axis=0)
    nses = jnp.sum((prediction - target) ** 2, axis=0) / jnp.sum(
        (target - means) ** 2, axis=0
    )
    return nses.mean()


if __name__ == "__main__":
    key = jax.random.PRNGKey(0)
    k1, k2, k3, k4, k5, k6, k7 = jax.random.split(key, 7)

    # Case 1/2: module-shaped small input (batch=8, subbasins=16).
    batch, subbasins = 8, 16
    prediction = jax.random.normal(k1, (batch, subbasins), dtype=jnp.float32)
    target = jax.random.normal(k2, (batch, subbasins), dtype=jnp.float32) + 0.5
    per_basin_means = jax.random.normal(k3, (subbasins,), dtype=jnp.float32) * 0.1

    out1 = jax.block_until_ready(nse_loss(prediction, target))
    ref1 = _nse_loss_ref(prediction, target)
    assert jnp.allclose(out1, ref1, rtol=1e-4, atol=1e-5), (out1, ref1)

    out2 = jax.block_until_ready(nse_loss(prediction, target, per_basin_means))
    ref2 = _nse_loss_ref(prediction, target, per_basin_means)
    assert jnp.allclose(out2, ref2, rtol=1e-4, atol=1e-5), (out2, ref2)

    # Case 3/4: exercise multi-tile batch accumulation + partial-tile masking.
    p3 = jax.random.normal(k4, (50, 16), dtype=jnp.float32)
    t3 = jax.random.normal(k5, (50, 16), dtype=jnp.float32) + 0.25
    out3 = jax.block_until_ready(nse_loss(p3, t3, max_block_rows=8))
    ref3 = _nse_loss_ref(p3, t3)
    assert jnp.allclose(out3, ref3, rtol=1e-4, atol=1e-5), (out3, ref3)

    m3 = jnp.mean(t3, axis=0) * 0.5
    out4 = jax.block_until_ready(nse_loss(p3, t3, m3, max_block_rows=8))
    ref4 = _nse_loss_ref(p3, t3, m3)
    assert jnp.allclose(out4, ref4, rtol=1e-4, atol=1e-5), (out4, ref4)

    # Case 5: exercise the parallel lane-split grid axis (S >= 256).
    p5 = jax.random.normal(k6, (64, 256), dtype=jnp.float32)
    t5 = jax.random.normal(k7, (64, 256), dtype=jnp.float32) + 0.5
    out5 = jax.block_until_ready(nse_loss(p5, t5, max_block_rows=16))
    ref5 = _nse_loss_ref(p5, t5)
    assert jnp.allclose(out5, ref5, rtol=1e-4, atol=1e-5), (out5, ref5)

    print("KERNEL_OK")
</pallas_src>

<mosaic_0001>
module attributes {stable_mosaic.version = 11 : i64} {
  func.func @kernel(%arg0: i32, %arg1: i32, %arg2: memref<1x128xf32, #tpu.memory_space<vmem>>, %arg3: memref<1x128xf32, #tpu.memory_space<vmem>>, %arg4: memref<1x128xf32, #tpu.memory_space<vmem>>, %arg5: memref<1x128xf32, #tpu.memory_space<vmem>>, %arg6: memref<1x128xf32, #tpu.memory_space<vmem>>) attributes {dimension_semantics = [#tpu.dimension_semantics<parallel>, #tpu.dimension_semantics<arbitrary>], iteration_bounds = array<i64: 1, 1>, scalar_prefetch = 0 : i64, scratch_operands = 0 : i64, tpu.core_type = #tpu.core_type<tc>, window_params = [{transform_indices = @transform_0, window_bounds = array<i64: 1, 128>}, {transform_indices = @transform_1, window_bounds = array<i64: 1, 128>}, {transform_indices = @transform_2, window_bounds = array<i64: 1, 128>}, {transform_indices = @transform_3, window_bounds = array<i64: 1, 128>}, {transform_indices = @transform_4, window_bounds = array<i64: 1, 128>}]} {
    %c0_i32 = arith.constant 0 : i32
    %0 = arith.cmpi eq, %arg1, %c0_i32 : i32
    %1 = arith.extui %0 : i1 to i32
    %c0_i32_0 = arith.constant 0 : i32
    %2 = arith.cmpi ne, %1, %c0_i32_0 : i32
    scf.if %2 {
      %cst_18 = arith.constant 0.000000e+00 : f32
      %23 = vector.broadcast %cst_18 : f32 to vector<1x128xf32>
      %c0_19 = arith.constant 0 : index
      %c0_20 = arith.constant 0 : index
      %24 = vector.load %arg4[%c0_19, %c0_20] : memref<1x128xf32, #tpu.memory_space<vmem>>, vector<1x128xf32>
      tpu.vector_store %arg4[%c0_19, %c0_20], %23 {strides = array<i32>} : memref<1x128xf32, #tpu.memory_space<vmem>>, vector<1x128xf32>,
      %cst_21 = arith.constant 0.000000e+00 : f32
      %25 = vector.broadcast %cst_21 : f32 to vector<1x128xf32>
      %c0_22 = arith.constant 0 : index
      %c0_23 = arith.constant 0 : index
      %26 = vector.load %arg5[%c0_22, %c0_23] : memref<1x128xf32, #tpu.memory_space<vmem>>, vector<1x128xf32>
      tpu.vector_store %arg5[%c0_22, %c0_23], %25 {strides = array<i32>} : memref<1x128xf32, #tpu.memory_space<vmem>>, vector<1x128xf32>,
      %cst_24 = arith.constant 0.000000e+00 : f32
      %27 = vector.broadcast %cst_24 : f32 to vector<1x128xf32>
      %c0_25 = arith.constant 0 : index
      %c0_26 = arith.constant 0 : index
      %28 = vector.load %arg6[%c0_25, %c0_26] : memref<1x128xf32, #tpu.memory_space<vmem>>, vector<1x128xf32>
      tpu.vector_store %arg6[%c0_25, %c0_26], %27 {strides = array<i32>} : memref<1x128xf32, #tpu.memory_space<vmem>>, vector<1x128xf32>,
    } else {
    }
    %c0 = arith.constant 0 : index
    %c0_1 = arith.constant 0 : index
    %3 = vector.load %arg2[%c0, %c0_1] : memref<1x128xf32, #tpu.memory_space<vmem>>, vector<1x128xf32>
    %c0_2 = arith.constant 0 : index
    %c0_3 = arith.constant 0 : index
    %4 = vector.load %arg3[%c0_2, %c0_3] : memref<1x128xf32, #tpu.memory_space<vmem>>, vector<1x128xf32>
    %5 = arith.subf %3, %4 : vector<1x128xf32>
    %6 = arith.mulf %5, %5 : vector<1x128xf32>
    %7 = arith.mulf %4, %4 : vector<1x128xf32>
    %c0_4 = arith.constant 0 : index
    %c0_5 = arith.constant 0 : index
    %8 = vector.load %arg4[%c0_4, %c0_5] : memref<1x128xf32, #tpu.memory_space<vmem>>, vector<1x128xf32>
    %cst = arith.constant dense<0.000000e+00> : vector<128xf32>
    %9 = vector.multi_reduction <add>, %6, %cst [0] : vector<1x128xf32> to vector<128xf32>
    %10 = vector.shape_cast %9 : vector<128xf32> to vector<1x128xf32>
    %11 = arith.addf %8, %10 : vector<1x128xf32>
    %c0_6 = arith.constant 0 : index
    %c0_7 = arith.constant 0 : index
    %12 = vector.load %arg4[%c0_6, %c0_7] : memref<1x128xf32, #tpu.memory_space<vmem>>, vector<1x128xf32>
    tpu.vector_store %arg4[%c0_6, %c0_7], %11 {strides = array<i32>} : memref<1x128xf32, #tpu.memory_space<vmem>>, vector<1x128xf32>,
    %c0_8 = arith.constant 0 : index
    %c0_9 = arith.constant 0 : index
    %13 = vector.load %arg5[%c0_8, %c0_9] : memref<1x128xf32, #tpu.memory_space<vmem>>, vector<1x128xf32>
    %cst_10 = arith.constant dense<0.000000e+00> : vector<128xf32>
    %14 = vector.multi_reduction <add>, %4, %cst_10 [0] : vector<1x128xf32> to vector<128xf32>
    %15 = vector.shape_cast %14 : vector<128xf32> to vector<1x128xf32>
    %16 = arith.addf %13, %15 : vector<1x128xf32>
    %c0_11 = arith.constant 0 : index
    %c0_12 = arith.constant 0 : index
    %17 = vector.load %arg5[%c0_11, %c0_12] : memref<1x128xf32, #tpu.memory_space<vmem>>, vector<1x128xf32>
    tpu.vector_store %arg5[%c0_11, %c0_12], %16 {strides = array<i32>} : memref<1x128xf32, #tpu.memory_space<vmem>>, vector<1x128xf32>,
    %c0_13 = arith.constant 0 : index
    %c0_14 = arith.constant 0 : index
    %18 = vector.load %arg6[%c0_13, %c0_14] : memref<1x128xf32, #tpu.memory_space<vmem>>, vector<1x128xf32>
    %cst_15 = arith.constant dense<0.000000e+00> : vector<128xf32>
    %19 = vector.multi_reduction <add>, %7, %cst_15 [0] : vector<1x128xf32> to vector<128xf32>
    %20 = vector.shape_cast %19 : vector<128xf32> to vector<1x128xf32>
    %21 = arith.addf %18, %20 : vector<1x128xf32>
    %c0_16 = arith.constant 0 : index
    %c0_17 = arith.constant 0 : index
    %22 = vector.load %arg6[%c0_16, %c0_17] : memref<1x128xf32, #tpu.memory_space<vmem>>, vector<1x128xf32>
    tpu.vector_store %arg6[%c0_16, %c0_17], %21 {strides = array<i32>} : memref<1x128xf32, #tpu.memory_space<vmem>>, vector<1x128xf32>,
    return
  }
  func.func @transform_0(%arg0: i32, %arg1: i32) -> (i32, i32) {
    %c0_i32 = arith.constant 0 : i32
    return %arg1, %arg0 : i32, i32
  }
  func.func @transform_1(%arg0: i32, %arg1: i32) -> (i32, i32) {
    %c0_i32 = arith.constant 0 : i32
    return %arg1, %arg0 : i32, i32
  }
  func.func @transform_2(%arg0: i32, %arg1: i32) -> (i32, i32) {
    %c0_i32 = arith.constant 0 : i32
    %c0_i32_0 = arith.constant 0 : i32
    return %c0_i32, %arg0 : i32, i32
  }
  func.func @transform_3(%arg0: i32, %arg1: i32) -> (i32, i32) {
    %c0_i32 = arith.constant 0 : i32
    %c0_i32_0 = arith.constant 0 : i32
    return %c0_i32, %arg0 : i32, i32
  }
  func.func @transform_4(%arg0: i32, %arg1: i32) -> (i32, i32) {
    %c0_i32 = arith.constant 0 : i32
    %c0_i32_0 = arith.constant 0 : i32
    return %c0_i32, %arg0 : i32, i32
  }
}

</mosaic_0001>

<llo_original>
// kernel: tpu_custom_call.1
$region0: #{tpu_custom_call.1}
  #allocation0 [shape = 'u32[]', space=smem, size = 0x4, offset = 0x4, fixed_abs, tag = 'smem constant byte address 0x4 - core index']
  #allocation1 [shape = 'u32[72,128]{1,0:T(1,128)}', space=vmem, size = 0x9000, scoped, tag = 'internal scratch']
  %s0 = inlined_call_operand.hbm [shape: f32[1,128], index: 0, kind: input, shape index: {}]
  %s1 = inlined_call_operand.hbm [shape: f32[1,128], index: 1, kind: input, shape index: {}]
  %s2 = inlined_call_operand.hbm [shape: f32[1,128], index: 2, kind: output, shape index: {0}]
  %s3 = inlined_call_operand.hbm [shape: f32[1,128], index: 3, kind: output, shape index: {1}]
  %s4 = inlined_call_operand.hbm [shape: f32[1,128], index: 4, kind: output, shape index: {2}]
  %5 = xla_tuple %s2, %s3, %s4
  %s6 = sld [smem:[#allocation0]]
  $region46: #{tpu_custom_call.1} parent=0
    _
  %s8 = ssub.s32 1, %s6
  %s9 = scalar_select 0, %s8, %s6
  $region1: #{tpu_custom_call.1} parent=0
    #allocation2 [shape = 'u8[512]{0}', space=vmem, size = 0x400, scoped, tag = 'input window, operand 0, single buffered']
    #allocation3 [shape = 's32[1]{0}', space=sflag, size = 0x4, scoped, tag = 'scoped memory for tpu_custom_call.1']
    #allocation4 [shape = 's32[1]{0}', space=sflag, size = 0x4, scoped, tag = 'scoped memory for tpu_custom_call.1']
    #allocation5 [shape = 'u8[512]{0}', space=vmem, size = 0x400, scoped, tag = 'input window, operand 1, single buffered']
    #allocation6 [shape = 's32[1]{0}', space=sflag, size = 0x4, scoped, tag = 'scoped memory for tpu_custom_call.1']
    #allocation7 [shape = 'u8[512]{0}', space=vmem, size = 0x400, scoped, tag = 'output window, operand 0, single buffered']
    #allocation8 [shape = 'u8[512]{0}', space=vmem, size = 0x400, scoped, tag = 'output window, operand 1, single buffered']
    #allocation9 [shape = 's32[1]{0}', space=sflag, size = 0x4, scoped, tag = 'scoped memory for tpu_custom_call.1']
    #allocation10 [shape = 'u8[512]{0}', space=vmem, size = 0x400, scoped, tag = 'output window, operand 2, single buffered']
    %10 = vsyncpa [#allocation3], 0
    %11 = vsyncpa [#allocation6], 0
    %12 = vsyncpa [#allocation4], 0
    %13 = vsyncpa [#allocation9], 0
    // Predicated region
    $region2: #{tpu_custom_call.1} parent=1 // pred_check
      _
    $region3: #{tpu_custom_call.1} parent=1 // pred_check_branch
      %15 = sbr.rel (0) target = $region5
    $region4: #{tpu_custom_call.1} parent=1 // pred_region
      %17 = vsyncadd [#allocation3], 0
      %s19 = sshll.u32 %s0, 4
      %s20 = int_to_ptr.hbm [resolvable:$true] %s19
      %s21 = sshll.u32 [#allocation2], 4
      %s22 = int_to_ptr.vmem [resolvable:$true] %s21
      %24 = dma.hbm_to_vmem [thread:$0]  %s20, 16, %s22, [#allocation3]
    $region5: #{tpu_custom_call.1} parent=1 // pred_fallthru
      _
    // Predicated region
    $region6: #{tpu_custom_call.1} parent=1 // pred_check
      _
    $region7: #{tpu_custom_call.1} parent=1 // pred_check_branch
      %26 = sbr.rel (0) target = $region9
    $region8: #{tpu_custom_call.1} parent=1 // pred_region
      %28 = vsyncadd [#allocation6], 0
      %s30 = sshll.u32 %s1, 4
      %s31 = int_to_ptr.hbm [resolvable:$true] %s30
      %s32 = sshll.u32 [#allocation5], 4
      %s33 = int_to_ptr.vmem [resolvable:$true] %s32
      %35 = dma.hbm_to_vmem [thread:$0]  %s31, 16, %s33, [#allocation6]
    $region9: #{tpu_custom_call.1} parent=1 // pred_fallthru
      _
    // Predicated region
    $region10: #{tpu_custom_call.1} parent=1 // pred_check
      _
    $region11: #{tpu_custom_call.1} parent=1 // pred_check_branch
      %37 = sbr.rel (0) target = $region13
    $region12: #{tpu_custom_call.1} parent=1 // pred_region
      %39 = dma.done [#allocation3], 16
    $region13: #{tpu_custom_call.1} parent=1 // pred_fallthru
      _
    // Predicated region
    $region14: #{tpu_custom_call.1} parent=1 // pred_check
      _
    $region15: #{tpu_custom_call.1} parent=1 // pred_check_branch
      %41 = sbr.rel (0) target = $region17
    $region16: #{tpu_custom_call.1} parent=1 // pred_region
      %43 = dma.done [#allocation6], 16
    $region17: #{tpu_custom_call.1} parent=1 // pred_fallthru
      _
    %p44 = scmp.eq.s32.totalorder 0, 0
    // Predicated region
    $region18: #{tpu_custom_call.1} parent=1 // pred_check
      %p45 = pneg %p44
    $region19: #{tpu_custom_call.1} parent=1 // pred_check_branch
      %47 = sbr.rel (%p45) target = $region21
    $region20: #{tpu_custom_call.1} parent=1 // pred_region
      %48 = vst [vmem:[#allocation7] sm:$0x1] 0.0
      %49 = vst [vmem:[#allocation8] sm:$0x1] 0.0
      %50 = vst [vmem:[#allocation10] sm:$0x1] 0.0
    $region21: #{tpu_custom_call.1} parent=1 // pred_fallthru
      _
    %v51 = vld [vmem:[#allocation2] sm:$0x1]
    %v52 = vld [vmem:[#allocation5] sm:$0x1]
    %v53 = vsub.f32 %v51, %v52
    %v54 = vmul.f32 %v53, %v53
    %v55 = vmul.f32 %v52, %v52
    %v56 = vld [vmem:[#allocation7] sm:$0x1]
    %v57 = vadd.f32 %v54, 0.0
    %v58 = vadd.f32 %v56, %v57
    %59 = vst [vmem:[#allocation7] sm:$0x1] %v58
    %v60 = vld [vmem:[#allocation8] sm:$0x1]
    %v61 = vadd.f32 %v52, 0.0
    %v62 = vadd.f32 %v60, %v61
    %63 = vst [vmem:[#allocation8] sm:$0x1] %v62
    %v64 = vld [vmem:[#allocation10] sm:$0x1]
    %v65 = vadd.f32 %v55, 0.0
    %v66 = vadd.f32 %v64, %v65
    %67 = vst [vmem:[#allocation10] sm:$0x1] %v66
    // Predicated region
    $region22: #{tpu_custom_call.1} parent=1 // pred_check
      _
    $region23: #{tpu_custom_call.1} parent=1 // pred_check_branch
      %69 = sbr.rel (0) target = $region25
    $region24: #{tpu_custom_call.1} parent=1 // pred_region
      %71 = vsyncadd [#allocation4], 0
      %s73 = sshll.u32 [#allocation7], 4
      %s74 = int_to_ptr.vmem [resolvable:$true] %s73
      %s75 = sshll.u32 %s2, 4
      %s76 = int_to_ptr.hbm [resolvable:$true] %s75
      %78 = dma.vmem_to_hbm [thread:$0]  %s74, 16, %s76, [#allocation4]
    $region25: #{tpu_custom_call.1} parent=1 // pred_fallthru
      _
    // Predicated region
    $region26: #{tpu_custom_call.1} parent=1 // pred_check
      _
    $region27: #{tpu_custom_call.1} parent=1 // pred_check_branch
      %80 = sbr.rel (0) target = $region29
    $region28: #{tpu_custom_call.1} parent=1 // pred_region
      %82 = vsyncadd [#allocation9], 0
      %s84 = sshll.u32 [#allocation8], 4
      %s85 = int_to_ptr.vmem [resolvable:$true] %s84
      %s86 = sshll.u32 %s3, 4
      %s87 = int_to_ptr.hbm [resolvable:$true] %s86
      %89 = dma.vmem_to_hbm [thread:$0]  %s85, 16, %s87, [#allocation9]
    $region29: #{tpu_custom_call.1} parent=1 // pred_fallthru
      _
    // Predicated region
    $region30: #{tpu_custom_call.1} parent=1 // pred_check
      _
    $region31: #{tpu_custom_call.1} parent=1 // pred_check_branch
      %91 = sbr.rel (0) target = $region33
    $region32: #{tpu_custom_call.1} parent=1 // pred_region
      %93 = vsyncadd [#allocation9], 0
      %s95 = sshll.u32 [#allocation10], 4
      %s96 = int_to_ptr.vmem [resolvable:$true] %s95
      %s97 = sshll.u32 %s4, 4
      %s98 = int_to_ptr.hbm [resolvable:$true] %s97
      %100 = dma.vmem_to_hbm [thread:$0]  %s96, 16, %s98, [#allocation9]
    $region33: #{tpu_custom_call.1} parent=1 // pred_fallthru
      _
    // Predicated region
    $region34: #{tpu_custom_call.1} parent=1 // pred_check
      _
    $region35: #{tpu_custom_call.1} parent=1 // pred_check_branch
      %102 = sbr.rel (0) target = $region37
    $region36: #{tpu_custom_call.1} parent=1 // pred_region
      %104 = dma.done [#allocation4], 16
    $region37: #{tpu_custom_call.1} parent=1 // pred_fallthru
      _
    // Predicated region
    $region38: #{tpu_custom_call.1} parent=1 // pred_check
      _
    $region39: #{tpu_custom_call.1} parent=1 // pred_check_branch
      %106 = sbr.rel (0) target = $region41
    $region40: #{tpu_custom_call.1} parent=1 // pred_region
      %108 = dma.done [#allocation9], 16
    $region41: #{tpu_custom_call.1} parent=1 // pred_fallthru
      _
    // Predicated region
    $region42: #{tpu_custom_call.1} parent=1 // pred_check
      _
    $region43: #{tpu_custom_call.1} parent=1 // pred_check_branch
      %110 = sbr.rel (0) target = $region45
    $region44: #{tpu_custom_call.1} parent=1 // pred_region
      %112 = dma.done [#allocation9], 16
    $region45: #{tpu_custom_call.1} parent=1 // pred_fallthru
      _
    %113 = vsyncpa [#allocation3], 1
    %114 = vsyncpa [#allocation6], 1
    %115 = vsyncpa [#allocation4], 1
    %116 = vsyncpa [#allocation9], 1

</llo_original>
